<compile_context>
chip_gen: v6e
topology: v6e:2x2x1
jax: 0.10.0
libtpu: 0.0.40
codegen_flags: <defaults>
</compile_context>

<pallas_src>
import numpy as np
import jax
import jax.numpy as jnp
from jax.experimental import pallas as pl
from jax.experimental.pallas import tpu as pltpu

# ---- model hyper-params (args.length = 64, args.in_channel = 4) -------------
SEQ_LEN   = 64
PRED_LEN  = 64
CHANNELS  = 4
BATCH     = 2
DOM_FREQ  = 720 // 24                          # 30
LENGTH_RATIO = (SEQ_LEN + PRED_LEN) / SEQ_LEN  # 2.0
UP_FREQ   = int(DOM_FREQ * LENGTH_RATIO)       # 60 (complex Linear output dim)
OUT_LEN   = SEQ_LEN + PRED_LEN                 # 128 (irfft output length)
FULL_FREQ = OUT_LEN // 2 + 1                   # 65 (bins >= UP_FREQ are zero)


# ------------------------------- kernel --------------------------------------
def _fits_kernel(x_ref, m_ref, bias_ref, xy_ref, lxy_ref):
    x = x_ref[...]                                           # (R, L) f32
    L = x.shape[1]
    # Row statistics (mean / unbiased variance over time), single pass over x.
    sum_x = jnp.sum(x, axis=1, keepdims=True)                # (R, 1)
    mean = sum_x * (1.0 / L)
    sum_x2 = jnp.sum(x * x, axis=1, keepdims=True)
    var = (sum_x2 - mean * sum_x) * (1.0 / (L - 1)) + 1e-5   # == var(x, ddof=1)+eps
    std = jnp.sqrt(var)                                      # EUP slot
    # mean-centering + rfft + complex Linear + zero-pad + irfft all folded into M.
    # Division/multiplication by std cancels exactly:  low_xy*std = (x-mean)@M.
    proj = jnp.dot(x.astype(jnp.bfloat16), m_ref[...],
                   preferred_element_type=jnp.float32)       # (R, OUT_LEN)
    scaled = proj + bias_ref[...] * std                      # == low_xy * sqrt(var)
    lxy_ref[...] = scaled
    xy_ref[...] = scaled + mean


# ----------------------- one-time constant folding ---------------------------
def build_folded_constants(wr, wi, br, bi):
    """One-time, host-side (numpy, f64) fold of: mean-centering, truncated rFFT,
    complex Linear(DOM_FREQ -> UP_FREQ), zero-pad, irFFT(n=OUT_LEN), *LENGTH_RATIO.
    Returns M: (SEQ_LEN, OUT_LEN) bf16 and time-domain bias: (1, OUT_LEN) f32.
    Call once per weight update; the forward path never rebuilds these."""
    wr = np.asarray(wr, np.float64); wi = np.asarray(wi, np.float64)
    br = np.asarray(br, np.float64); bi = np.asarray(bi, np.float64)
    L, N = SEQ_LEN, OUT_LEN

    t = np.arange(L); k = np.arange(DOM_FREQ)
    ang = 2.0 * np.pi * np.outer(t, k) / L                   # (L, DOM)
    fct, fst = np.cos(ang), np.sin(ang)

    n = np.arange(N); kk = np.arange(UP_FREQ)
    ang2 = 2.0 * np.pi * np.outer(kk, n) / N                 # (UP, N)
    coeff = np.where(kk == 0, 1.0, 2.0)[:, None] / N         # 1/N for DC, 2/N else
    cmat = coeff * np.cos(ang2)                              # (UP, N)
    smat = coeff * np.sin(ang2)                              # row 0 = 0 -> imag(DC)
                                                             #   dropped (torch c2r)
    wrt, wit = wr.T, wi.T                                    # (DOM, UP)
    a_re = fct @ wrt + fst @ wit                             # (L, UP)
    a_im = fct @ wit - fst @ wrt                             # (L, UP)
    m = LENGTH_RATIO * (a_re @ cmat - a_im @ smat)           # (L, N)
    bias = LENGTH_RATIO * (br @ cmat - bi @ smat)            # (N,)

    # Fold the mean-centering projector (I - 11^T / L) into M.
    m = (np.eye(L) - np.full((L, L), 1.0 / L)) @ m

    return (jnp.asarray(m, jnp.bfloat16),
            jnp.asarray(bias.reshape(1, N), jnp.float32))


def init_params(key):
    # deterministic init of the complex Linear(DOM_FREQ -> UP_FREQ)
    k1, k2, k3, k4 = jax.random.split(key, 4)
    bound = 1.0 / np.sqrt(DOM_FREQ)
    wr = jax.random.uniform(k1, (UP_FREQ, DOM_FREQ), jnp.float32, -bound, bound)
    wi = jax.random.uniform(k2, (UP_FREQ, DOM_FREQ), jnp.float32, -bound, bound)
    br = jax.random.uniform(k3, (UP_FREQ,), jnp.float32, -bound, bound)
    bi = jax.random.uniform(k4, (UP_FREQ,), jnp.float32, -bound, bound)
    return wr, wi, br, bi


# ------------------------------- forward --------------------------------------
def fits_forward_rows(x_rows, m, bias):
    """Hot path.  x_rows: (B*C, SEQ_LEN) f32 (channel-major rows),
    m/bias: folded constants from build_folded_constants().
    Returns (xy, low_xy*sqrt(var)), each (B*C, OUT_LEN) f32."""
    rows, L = x_rows.shape
    vmem = pltpu.MemorySpace.VMEM
    cost = pl.CostEstimate(
        flops=2 * rows * L * OUT_LEN,
        transcendentals=rows,
        bytes_accessed=(x_rows.size * 4 + m.size * 2 + bias.size * 4
                        + 2 * rows * OUT_LEN * 4),
    )
    # Single invocation, no grid: all operands (~30 KiB total) live in VMEM.
    # (If B*C ever grows, add a leading "parallel" row-block grid axis instead
    #  of splitting K/N — see review; not needed at 8 rows.)
    return pl.pallas_call(
        _fits_kernel,
        out_shape=(jax.ShapeDtypeStruct((rows, OUT_LEN), jnp.float32),
                   jax.ShapeDtypeStruct((rows, OUT_LEN), jnp.float32)),
        in_specs=[pl.BlockSpec(memory_space=vmem),
                  pl.BlockSpec(memory_space=vmem),
                  pl.BlockSpec(memory_space=vmem)],
        out_specs=(pl.BlockSpec(memory_space=vmem),
                   pl.BlockSpec(memory_space=vmem)),
        cost_estimate=cost,
    )(x_rows, m, bias)


def fits_forward(x, m, bias):
    """Module-interface wrapper (PyTorch layout): x (B, L, C) ->
    (xy, low_xy*sqrt(var)), each (B, OUT_LEN, C).  The relayouts here cost
    roughly as much as the kernel itself — prefer fits_forward_rows when the
    producer/consumer can use the channel-major row layout directly."""
    B, L, C = x.shape
    x_rows = jnp.transpose(x, (0, 2, 1)).reshape(B * C, L)
    xy_r, lxy_r = fits_forward_rows(x_rows, m, bias)
    xy = jnp.transpose(xy_r.reshape(B, C, OUT_LEN), (0, 2, 1))
    lxy = jnp.transpose(lxy_r.reshape(B, C, OUT_LEN), (0, 2, 1))
    return xy, lxy


# ------------------------------ reference -------------------------------------
def fits_reference(x, wr, wi, br, bi):
    """Pure-JAX reference mirroring the PyTorch forward."""
    x_mean = jnp.mean(x, axis=1, keepdims=True)
    xc = x - x_mean
    x_var = jnp.var(xc, axis=1, keepdims=True, ddof=1) + 1e-5
    xn = xc / jnp.sqrt(x_var)
    spec = jnp.fft.rfft(xn, axis=1)[:, :DOM_FREQ, :]                # (B, DOM, C)
    w = wr + 1j * wi
    b = br + 1j * bi
    up = jnp.einsum('bkc,fk->bfc', spec, w) + b[None, :, None]      # (B, UP, C)
    full = jnp.zeros((x.shape[0], FULL_FREQ, x.shape[2]), dtype=up.dtype)
    full = full.at[:, :UP_FREQ, :].set(up)
    # drop imag(DC) so the check is irfft-convention-agnostic (torch drops it too)
    full = full.at[:, 0, :].set(full[:, 0, :].real.astype(full.dtype))
    low_xy = jnp.fft.irfft(full, n=OUT_LEN, axis=1) * LENGTH_RATIO
    scaled = low_xy * jnp.sqrt(x_var)
    return scaled + x_mean, scaled


if __name__ == "__main__":
    key = jax.random.PRNGKey(0)
    kx, kp = jax.random.split(key)
    x = jax.random.normal(kx, (BATCH, SEQ_LEN, CHANNELS), jnp.float32)
    wr, wi, br, bi = init_params(kp)

    # One-time constant fold, hoisted out of the per-call path.
    m, bias = build_folded_constants(wr, wi, br, bi)

    # Channel-major rows layout, prepared once outside the hot forward.
    x_rows = jnp.transpose(x, (0, 2, 1)).reshape(BATCH * CHANNELS, SEQ_LEN)

    fwd = jax.jit(fits_forward_rows)
    xy_r, lxy_r = jax.block_until_ready(fwd(x_rows, m, bias))

    # Back to the module's (B, OUT_LEN, C) layout for the semantic check only.
    xy = np.transpose(np.asarray(xy_r).reshape(BATCH, CHANNELS, OUT_LEN), (0, 2, 1))
    lxy = np.transpose(np.asarray(lxy_r).reshape(BATCH, CHANNELS, OUT_LEN), (0, 2, 1))

    ref_xy, ref_low = fits_reference(x, wr, wi, br, bi)
    assert np.allclose(xy, np.asarray(ref_xy), atol=1e-2, rtol=1e-2), \
        float(np.max(np.abs(xy - np.asarray(ref_xy))))
    assert np.allclose(lxy, np.asarray(ref_low), atol=1e-2, rtol=1e-2), \
        float(np.max(np.abs(lxy - np.asarray(ref_low))))

    print("KERNEL_OK")
</pallas_src>

<mosaic_0001>
module attributes {stable_mosaic.version = 11 : i64} {
  func.func @_fits_kernel(%arg0: memref<8x64xf32, #tpu.memory_space<vmem>>, %arg1: memref<64x128xbf16, #tpu.memory_space<vmem>>, %arg2: memref<1x128xf32, #tpu.memory_space<vmem>>, %arg3: memref<8x128xf32, #tpu.memory_space<vmem>>, %arg4: memref<8x128xf32, #tpu.memory_space<vmem>>) attributes {dimension_semantics = [], scalar_prefetch = 0 : i64, scratch_operands = 0 : i64, tpu.core_type = #tpu.core_type<tc>} {
    %c0 = arith.constant 0 : index
    %c0_0 = arith.constant 0 : index
    %0 = vector.load %arg0[%c0, %c0_0] : memref<8x64xf32, #tpu.memory_space<vmem>>, vector<8x64xf32>
    %cst = arith.constant dense<0.000000e+00> : vector<8xf32>
    %1 = vector.multi_reduction <add>, %0, %cst [1] : vector<8x64xf32> to vector<8xf32>
    %2 = vector.shape_cast %1 : vector<8xf32> to vector<8x1xf32>
    %cst_1 = arith.constant 1.562500e-02 : f32
    %3 = vector.broadcast %cst_1 : f32 to vector<8x1xf32>
    %4 = arith.mulf %2, %3 : vector<8x1xf32>
    %5 = arith.mulf %0, %0 : vector<8x64xf32>
    %cst_2 = arith.constant dense<0.000000e+00> : vector<8xf32>
    %6 = vector.multi_reduction <add>, %5, %cst_2 [1] : vector<8x64xf32> to vector<8xf32>
    %7 = vector.shape_cast %6 : vector<8xf32> to vector<8x1xf32>
    %8 = arith.mulf %4, %2 : vector<8x1xf32>
    %9 = arith.subf %7, %8 : vector<8x1xf32>
    %cst_3 = arith.constant 0.0158730168 : f32
    %10 = vector.broadcast %cst_3 : f32 to vector<8x1xf32>
    %11 = arith.mulf %9, %10 : vector<8x1xf32>
    %cst_4 = arith.constant 9.99999974E-6 : f32
    %12 = vector.broadcast %cst_4 : f32 to vector<8x1xf32>
    %13 = arith.addf %11, %12 : vector<8x1xf32>
    %14 = math.sqrt %13 : vector<8x1xf32>
    %15 = arith.truncf %0 : vector<8x64xf32> to vector<8x64xbf16>
    %c0_5 = arith.constant 0 : index
    %c0_6 = arith.constant 0 : index
    %16 = vector.load %arg1[%c0_5, %c0_6] : memref<64x128xbf16, #tpu.memory_space<vmem>>, vector<64x128xbf16>
    %cst_7 = arith.constant dense<0.000000e+00> : vector<8x128xf32>
    %17 = tpu.matmul %15, %16, %cst_7 {dimension_numbers = #tpu.dot_dimension_numbers<[1], [0], [0], [1], [0, 0, 1, 1], [], []>} : vector<8x64xbf16>, vector<64x128xbf16>, vector<8x128xf32> -> vector<8x128xf32>
    %c0_8 = arith.constant 0 : index
    %c0_9 = arith.constant 0 : index
    %18 = vector.load %arg2[%c0_8, %c0_9] : memref<1x128xf32, #tpu.memory_space<vmem>>, vector<1x128xf32>
    %19 = vector.broadcast %18 : vector<1x128xf32> to vector<8x128xf32>
    %20 = vector.broadcast %14 : vector<8x1xf32> to vector<8x128xf32>
    %21 = arith.mulf %19, %20 : vector<8x128xf32>
    %22 = arith.addf %17, %21 : vector<8x128xf32>
    %c0_10 = arith.constant 0 : index
    %c0_11 = arith.constant 0 : index
    %23 = vector.load %arg4[%c0_10, %c0_11] : memref<8x128xf32, #tpu.memory_space<vmem>>, vector<8x128xf32>
    tpu.vector_store %arg4[%c0_10, %c0_11], %22 {strides = array<i32>} : memref<8x128xf32, #tpu.memory_space<vmem>>, vector<8x128xf32>,
    %24 = vector.broadcast %4 : vector<8x1xf32> to vector<8x128xf32>
    %25 = arith.addf %22, %24 : vector<8x128xf32>
    %c0_12 = arith.constant 0 : index
    %c0_13 = arith.constant 0 : index
    %26 = vector.load %arg3[%c0_12, %c0_13] : memref<8x128xf32, #tpu.memory_space<vmem>>, vector<8x128xf32>
    tpu.vector_store %arg3[%c0_12, %c0_13], %25 {strides = array<i32>} : memref<8x128xf32, #tpu.memory_space<vmem>>, vector<8x128xf32>,
    return
  }
}

</mosaic_0001>

<llo_original>
// kernel: fits_forward_rows.1
$region0: #{fits_forward_rows.1}
  #allocation0 [shape = 'u32[]', space=smem, size = 0x4, offset = 0x4, fixed_abs, tag = 'smem constant byte address 0x4 - core index']
  #allocation1 [shape = 'u32[144,128]{1,0:T(1,128)}', space=vmem, size = 0x12000, scoped, tag = 'internal scratch']
  %s0 = inlined_call_operand.hbm [shape: f32[8,64], index: 0, kind: input, shape index: {}]
  %s1 = inlined_call_operand.hbm [shape: bf16[64,128], index: 1, kind: input, shape index: {}]
  %s2 = inlined_call_operand.vmem [shape: f32[1,128], index: 2, kind: input, shape index: {}]
  %s3 = inlined_call_operand.hbm [shape: f32[8,128], index: 3, kind: output, shape index: {0}]
  %s4 = inlined_call_operand.hbm [shape: f32[8,128], index: 4, kind: output, shape index: {1}]
  %5 = xla_tuple %s3, %s4
  %s6 = sld [smem:[#allocation0]]
  $region38: #{fits_forward_rows.1} parent=0
    _
  %s8 = ssub.s32 1, %s6
  %s9 = scalar_select 0, %s8, %s6
  $region1: #{fits_forward_rows.1} parent=0
    #allocation2 [shape = 'u8[4096]{0}', space=vmem, size = 0x1000, scoped, tag = 'input window, operand 0, single buffered']
    #allocation3 [shape = 's32[1]{0}', space=sflag, size = 0x4, scoped, tag = 'scoped memory for fits_forward_rows.1']
    #allocation4 [shape = 's32[1]{0}', space=sflag, size = 0x4, scoped, tag = 'scoped memory for fits_forward_rows.1']
    #allocation5 [shape = 'u8[16384]{0}', space=vmem, size = 0x4000, scoped, tag = 'input window, operand 1, single buffered']
    #allocation6 [shape = 's32[1]{0}', space=sflag, size = 0x4, scoped, tag = 'scoped memory for fits_forward_rows.1']
    #allocation7 [shape = 'u8[4096]{0}', space=vmem, size = 0x1000, scoped, tag = 'output window, operand 0, single buffered']
    #allocation8 [shape = 'u8[4096]{0}', space=vmem, size = 0x1000, scoped, tag = 'output window, operand 1, single buffered']
    #allocation9 [shape = 's32[1]{0}', space=sflag, size = 0x4, scoped, tag = 'scoped memory for fits_forward_rows.1']
    %10 = vsyncpa [#allocation3], 0
    %11 = vsyncpa [#allocation6], 0
    %12 = vsyncpa [#allocation4], 0
    %13 = vsyncpa [#allocation9], 0
    // Predicated region
    $region2: #{fits_forward_rows.1} parent=1 // pred_check
      _
    $region3: #{fits_forward_rows.1} parent=1 // pred_check_branch
      %15 = sbr.rel (0) target = $region5
    $region4: #{fits_forward_rows.1} parent=1 // pred_region
      %s17 = ssub.s32 128, 128
      %18 = vsyncadd [#allocation3], %s17
      %s20 = sshll.u32 [#allocation2], 4
      %s21 = int_to_ptr.vmem [resolvable:$true] %s20
      %23 = dma.hbm_to_vmem [thread:$0]  %s0, 128, %s21, [#allocation3]
    $region5: #{fits_forward_rows.1} parent=1 // pred_fallthru
      _
    // Predicated region
    $region6: #{fits_forward_rows.1} parent=1 // pred_check
      _
    $region7: #{fits_forward_rows.1} parent=1 // pred_check_branch
      %25 = sbr.rel (0) target = $region9
    $region8: #{fits_forward_rows.1} parent=1 // pred_region
      %s27 = ssub.s32 512, 512
      %28 = vsyncadd [#allocation6], %s27
      %s29 = sshll.u32 [#allocation5], 4
      %s30 = int_to_ptr.vmem [resolvable:$true] %s29
      %35 = dma.hbm_to_vmem [thread:$0]  %s1, 512, %s30, [#allocation6], 64, 64, 4
    $region9: #{fits_forward_rows.1} parent=1 // pred_fallthru
      _
    // Predicated region
    $region10: #{fits_forward_rows.1} parent=1 // pred_check
      _
    $region11: #{fits_forward_rows.1} parent=1 // pred_check_branch
      %37 = sbr.rel (0) target = $region13
    $region12: #{fits_forward_rows.1} parent=1 // pred_region
      _
    $region13: #{fits_forward_rows.1} parent=1 // pred_fallthru
      _
    // Predicated region
    $region14: #{fits_forward_rows.1} parent=1 // pred_check
      _
    $region15: #{fits_forward_rows.1} parent=1 // pred_check_branch
      %39 = sbr.rel (0) target = $region17
    $region16: #{fits_forward_rows.1} parent=1 // pred_region
      %40 = dma.done [#allocation3], 128
    $region17: #{fits_forward_rows.1} parent=1 // pred_fallthru
      _
    // Predicated region
    $region18: #{fits_forward_rows.1} parent=1 // pred_check
      _
    $region19: #{fits_forward_rows.1} parent=1 // pred_check_branch
      %42 = sbr.rel (0) target = $region21
    $region20: #{fits_forward_rows.1} parent=1 // pred_region
      %43 = dma.done [#allocation6], 512
    $region21: #{fits_forward_rows.1} parent=1 // pred_fallthru
      _
    %v45 = vld [vmem:[#allocation2] sm:$0xff]
    %vm46 = vcmask 523264
    %v47 = vsel %vm46, %v45, 0.0
    %48 = vadd.xlane.f32.xlu0 %v47
    %v49 = vpop.xlane.xlu0 %48
    %v50 = vmul.f32 %v49, 0.015625
    %v51 = vmul.f32 %v45, %v45
    %v52 = vsel %vm46, %v51, 0.0
    %53 = vadd.xlane.f32.xlu0 %v52
    %v54 = vpop.xlane.xlu0 %53
    %v55 = vmul.f32 %v50, %v49
    %v56 = vsub.f32 %v54, %v55
    %v57 = vmul.f32 %v56, 0.015873017
    %v58 = vadd.f32 %v57, 1e-05
    %v59 = vrsqrt.pop %v58
    %v60 = vmul.f32 %v58, %v59
    %vm61 = vcmp.eq.f32.partialorder %v58, inf
    %v62 = vsel %vm61, %v58, %v60
    %vm63 = vcmp.eq.f32.partialorder %v58, 0.0
    %v64 = vand.u32 %v58, 2147483648
    %v65 = vsel %vm63, %v64, %v62
    %v66 = vpack.c.bf16 %v45, %v45
    %v67 = vld [vmem:[#allocation5] sm:$0xf]
    %v68 = vld [vmem:[#allocation5 + $0x4] sm:$0xf]
    %v69 = vld [vmem:[#allocation5 + $0x8] sm:$0xf]
    %v70 = vld [vmem:[#allocation5 + $0xc] sm:$0xf]
    %v71 = vld [vmem:[#allocation5 + $0x10] sm:$0xf]
    %v72 = vld [vmem:[#allocation5 + $0x14] sm:$0xf]
    %v73 = vld [vmem:[#allocation5 + $0x18] sm:$0xf]
    %v74 = vld [vmem:[#allocation5 + $0x1c] sm:$0xf]
    %v75 = vld [vmem:[%s2] sm:$0x1]
    %v77 = vlaneseq
    %v78 = vshrl.u32 %v77, 7
    %v79 = vsub.s32 0, %v78
    %v80 = vrot.slane %v75, %v79
    %v82 = vmul.f32 %v80, %v65
    %v91 = vunpack.c.l.b16 %v67
    %v92 = vunpack.c.l.b16 %v68
    %v93 = vunpack.c.l.b16 %v69
    %v94 = vunpack.c.l.b16 %v70
    %v95 = vunpack.c.l.b16 %v71
    %v96 = vunpack.c.l.b16 %v72
    %v97 = vunpack.c.l.b16 %v73
    %v98 = vunpack.c.l.b16 %v74
    %v99 = vpack.c.b16 %v92, %v91
    %v100 = vpack.c.b16 %v94, %v93
    %v101 = vpack.c.b16 %v96, %v95
    %v102 = vpack.c.b16 %v98, %v97
    %v108 = vsel %vm46, %v66, 0
    %110 = vmatprep.subr.bf16.mxu0 0
    %111 = vmatpush1.bf16.msra.mxu0 0
    %112 = vmatprep.subr.bf16.mxu0 0
    %113 = vmatpush1.bf16.msra.mxu0 0
    %114 = vmatprep.subr.bf16.mxu0 0
    %115 = vmatpush1.bf16.msra.mxu0 0
    %116 = vmatprep.subr.bf16.mxu0 0
    %117 = vmatpush1.bf16.msra.mxu0 0
    %118 = vmatprep.subr.bf16.mxu0 0
    %119 = vmatpush1.bf16.msra.mxu0 %v102
    %120 = vmatprep.subr.bf16.mxu0 0
    %121 = vmatpush1.bf16.msra.mxu0 %v101
    %122 = vmatprep.subr.bf16.mxu0 0
    %123 = vmatpush1.bf16.msra.mxu0 %v100
    %124 = vmatprep.subr.bf16.mxu0 0
    %125 = vmatpush1.bf16.msra.mxu0 %v99
    %126 = vmatprep.subr.bf16.mxu0 0
    %127 = vmatpush2.bf16.msra.mxu0 0
    %128 = vmatprep.subr.bf16.mxu0 0
    %129 = vmatpush2.bf16.msra.mxu0 0
    %130 = vmatprep.subr.bf16.mxu0 0
    %131 = vmatpush2.bf16.msra.mxu0 0
    %132 = vmatprep.subr.bf16.mxu0 0
    %133 = vmatpush2.bf16.msra.mxu0 0
    %134 = vmatprep.subr.bf16.mxu0 0
    %135 = vmatpush2.bf16.msra.mxu0 0
    %136 = vmatprep.subr.bf16.mxu0 0
    %137 = vmatpush2.bf16.msra.mxu0 0
    %138 = vmatprep.subr.bf16.mxu0 0
    %139 = vmatpush2.bf16.msra.mxu0 0
    %140 = vmatprep.subr.bf16.mxu0 0
    %141 = vmatpush2.bf16.msra.mxu0 0
    %142 = vmatprep.mubr.bf16.mxu0 0
    %143 = vmatmul.mubr.bf16.gmra.mxu0 %v108
    %v144 = vpop.f32.mrf.mxu0
    %v145 = vadd.f32 %v82, %v144
    %v146 = vpop.f32.mrf.mxu0
    %v147 = vpop.f32.mrf.mxu0
    %v148 = vpop.f32.mrf.mxu0
    %149 = vdwg.mxu0
    %150 = vst [vmem:[#allocation8] sm:$0xff] %v145
    %v151 = vadd.f32 %v145, %v50
    %152 = vst [vmem:[#allocation7] sm:$0xff] %v151
    // Predicated region
    $region22: #{fits_forward_rows.1} parent=1 // pred_check
      _
    $region23: #{fits_forward_rows.1} parent=1 // pred_check_branch
      %154 = sbr.rel (0) target = $region25
    $region24: #{fits_forward_rows.1} parent=1 // pred_region
      %s156 = ssub.s32 128, 128
      %157 = vsyncadd [#allocation4], %s156
      %s159 = sshll.u32 [#allocation7], 4
      %s160 = int_to_ptr.vmem [resolvable:$true] %s159
      %162 = dma.vmem_to_hbm [thread:$0]  %s160, 128, %s3, [#allocation4]
    $region25: #{fits_forward_rows.1} parent=1 // pred_fallthru
      _
    // Predicated region
    $region26: #{fits_forward_rows.1} parent=1 // pred_check
      _
    $region27: #{fits_forward_rows.1} parent=1 // pred_check_branch
      %164 = sbr.rel (0) target = $region29
    $region28: #{fits_forward_rows.1} parent=1 // pred_region
      %s166 = ssub.s32 128, 128
      %167 = vsyncadd [#allocation9], %s166
      %s169 = sshll.u32 [#allocation8], 4
      %s170 = int_to_ptr.vmem [resolvable:$true] %s169
      %172 = dma.vmem_to_hbm [thread:$0]  %s170, 128, %s4, [#allocation9]
    $region29: #{fits_forward_rows.1} parent=1 // pred_fallthru
      _
    // Predicated region
    $region30: #{fits_forward_rows.1} parent=1 // pred_check
      _
    $region31: #{fits_forward_rows.1} parent=1 // pred_check_branch
      %174 = sbr.rel (0) target = $region33
    $region32: #{fits_forward_rows.1} parent=1 // pred_region
      %175 = dma.done [#allocation4], 128
    $region33: #{fits_forward_rows.1} parent=1 // pred_fallthru
      _
    // Predicated region
    $region34: #{fits_forward_rows.1} parent=1 // pred_check
      _
    $region35: #{fits_forward_rows.1} parent=1 // pred_check_branch
      %177 = sbr.rel (0) target = $region37
    $region36: #{fits_forward_rows.1} parent=1 // pred_region
      %178 = dma.done [#allocation9], 128
    $region37: #{fits_forward_rows.1} parent=1 // pred_fallthru
      _
    %179 = vsyncpa [#allocation3], 1
    %180 = vsyncpa [#allocation6], 1
    %181 = vsyncpa [#allocation4], 1
    %182 = vsyncpa [#allocation9], 1

</llo_original>
